<compile_context>
chip_gen: v5e
topology: v5e:2x2
jax: 0.10.0
libtpu: 0.0.40
codegen_flags: <defaults>
</compile_context>

<pallas_src>
import functools

import jax
import jax.numpy as jnp
from jax import lax
from jax.experimental import pallas as pl
from jax.experimental.pallas import tpu as pltpu


def _round_up(x, m):
    return ((x + m - 1) // m) * m


def _cdiv(a, b):
    return (a + b - 1) // b


def _pick_tile_b(B, H):
    """Batch-tile rows sized by bytes, VMEM-capped, >=2 grid steps for v7x."""
    row_bytes = 4 * H
    tile = (2 << 20) // row_bytes                      # ~2 MiB f32 input block
    tile = min(tile, (12 << 20) // (4 * row_bytes))    # 2x-buffered in+out cap
    tile = max(8, (tile // 8) * 8)
    if B > 8:
        # guarantee >= 2 grid steps so ("parallel",) shards over both TCs on
        # v7x (a no-op on the single-TC v5e/v6e parts)
        tile = min(tile, max(8, _round_up(_cdiv(B, 2), 8)))
    if tile >= B:
        return B                                       # one full-batch block
    return tile


# --------------------------------------------------------------------------
# Fused kernel: insight mean -> projection (VPU, no MXU) -> alpha-scaled
# residual add -> LayerNorm; plus mean(|influence|) as a (1,1) output.
# Gridded over batch tiles, marked "parallel" (megacore / 2 TCs on v7x).
# --------------------------------------------------------------------------
def _wisdom_fused_kernel(insights_t_ref, w_out_ref, b_out_ref, alpha_ref,
                         ln_ref, hidden_ref, out_ref, absmean_ref,
                         *, n_insights, h):
    # ---- wisdom influence (batch independent; tiny, recomputed per tile) ---
    ins = insights_t_ref[...].astype(jnp.float32)                     # (W, N)
    avg = jnp.sum(ins, axis=1, keepdims=True) * (1.0 / n_insights)    # (W, 1)
    # output_projection on the VPU: broadcast-multiply + sublane reduce
    infl = (jnp.sum(avg * w_out_ref[...], axis=0, keepdims=True)
            + b_out_ref[...])                                          # (1, H)
    # Same value on every grid step -> idempotent write, parallel-safe.
    absmean_ref[...] = jnp.sum(jnp.abs(infl), axis=1, keepdims=True) * (1.0 / h)

    # ---- residual add + LayerNorm over the hidden dim -----------------------
    x = hidden_ref[...].astype(jnp.float32) + alpha_ref[...] * infl   # (TB, H)
    mu = jnp.sum(x, axis=-1, keepdims=True) * (1.0 / h)
    d = x - mu
    var = jnp.sum(d * d, axis=-1, keepdims=True) * (1.0 / h)
    xn = d * lax.rsqrt(var + 1e-5)
    ln = ln_ref[...]                                                  # (2, H)
    out_ref[...] = (xn * ln[0:1, :] + ln[1:2, :]).astype(out_ref.dtype)


# --------------------------------------------------------------------------
# Jittable numeric core: one pallas_call, no padding, no slicing.
# --------------------------------------------------------------------------
@functools.partial(jax.jit, static_argnames=("tile_b", "out_dtype"))
def _wisdom_forward_core(hidden, insights, w_out, b_out, gamma, beta, alpha,
                         *, tile_b=None, out_dtype=None):
    f32 = jnp.float32
    B, H = hidden.shape
    N, W = insights.shape
    out_dtype = hidden.dtype if out_dtype is None else out_dtype

    if tile_b is None:
        tb = _pick_tile_b(B, H)
    else:
        tb = max(1, min(int(tile_b), B))
        if tb < B:
            tb = _round_up(max(tb, 8), 8)
            if tb >= B:
                tb = B
    grid = (_cdiv(B, tb),)

    # Tiny parameter reshapes (negligible; fused by XLA inside this jit).
    insights_t = insights.astype(f32).T                               # (W, N)
    w_out_f = w_out.astype(f32)                                       # (W, H)
    b_out_f = b_out.reshape(1, H).astype(f32)                         # (1, H)
    ln = jnp.concatenate([gamma.reshape(1, H).astype(f32),
                          beta.reshape(1, H).astype(f32)], axis=0)    # (2, H)
    alpha_f = jnp.reshape(alpha, (1, 1)).astype(f32)                  # (1, 1)

    out, absmean = pl.pallas_call(
        functools.partial(_wisdom_fused_kernel, n_insights=N, h=H),
        out_shape=(jax.ShapeDtypeStruct((B, H), out_dtype),
                   jax.ShapeDtypeStruct((1, 1), f32)),
        grid=grid,
        in_specs=[pl.BlockSpec((W, N), lambda i: (0, 0)),
                  pl.BlockSpec((W, H), lambda i: (0, 0)),
                  pl.BlockSpec((1, H), lambda i: (0, 0)),
                  pl.BlockSpec((1, 1), lambda i: (0, 0)),
                  pl.BlockSpec((2, H), lambda i: (0, 0)),
                  pl.BlockSpec((tb, H), lambda i: (i, 0))],
        out_specs=(pl.BlockSpec((tb, H), lambda i: (i, 0)),
                   pl.BlockSpec((1, 1), lambda i: (0, 0))),
        compiler_params=pltpu.CompilerParams(
            dimension_semantics=("parallel",),
            vmem_limit_bytes=32 * 1024 * 1024),
    )(insights_t, w_out_f, b_out_f, alpha_f, ln, hidden)

    return out, absmean[0, 0]


def wisdom_integration_forward(hidden, insights, params, *, max_insights=10,
                               insight_categories=None, tile_b=None,
                               out_dtype=None):
    """hidden: (B, H) f32; insights: (N, W) f32 insight embeddings."""
    if hidden.ndim == 1:
        hidden = hidden[None, :]
    if insights.shape[0] == 0:
        return hidden, {"integrated_insights": 0, "wisdom_influence": 0.0,
                        "insight_categories": {}}
    insights = insights[:max_insights]
    integrated, absmean = _wisdom_forward_core(
        hidden, insights, params["w_out"], params["b_out"],
        params["gamma"], params["beta"], params["alpha"],
        tile_b=tile_b, out_dtype=out_dtype)
    wisdom_info = {
        "integrated_insights": int(insights.shape[0]),  # static shape, no sync
        # device scalar -- no float()/item(), so no forced host sync here
        "wisdom_influence": absmean,
        "insight_categories": insight_categories or {},
        "attention_weights": [],  # attention always raises -> None/[] in torch
    }
    return integrated, wisdom_info


# --------------------------------------------------------------------------
# Deterministic parameter construction (shapes from the module __init__).
# --------------------------------------------------------------------------
def init_params(key, hidden_dim, wisdom_dim):
    ks = jax.random.split(key, 8)
    u = lambda k, shp, fan_in: jax.random.uniform(
        k, shp, jnp.float32, -1.0 / jnp.sqrt(fan_in), 1.0 / jnp.sqrt(fan_in))
    return {
        # output_projection: Linear(wisdom_dim -> hidden_dim); stored (in, out)
        "w_out": u(ks[0], (wisdom_dim, hidden_dim), wisdom_dim),
        "b_out": u(ks[1], (1, hidden_dim), wisdom_dim),
        "gamma": jnp.ones((1, hidden_dim), jnp.float32),
        "beta": jnp.zeros((1, hidden_dim), jnp.float32),
        "alpha": jnp.full((1,), 0.1, jnp.float32),   # integration_weight
        # Present in the module but never affect the output (attention always
        # raises); kept for structural completeness only.
        "w_query": u(ks[2], (hidden_dim, wisdom_dim // 2), hidden_dim),
        "w_key":   u(ks[3], (wisdom_dim, wisdom_dim // 2), wisdom_dim),
        "w_value": u(ks[4], (wisdom_dim, wisdom_dim), wisdom_dim),
    }


def _det_hash(s, mod):
    # deterministic stand-in for Python's (salted) hash()
    return sum((i + 1) * ord(c) for i, c in enumerate(s)) % mod


def create_insight_embedding(key, wisdom_dim, wtype, intensity, content):
    """Mirrors _create_insight_embedding: one-hot type slot, intensity slot,
    content-hash slot, Gaussian noise tail."""
    emb = jnp.zeros((wisdom_dim,), jnp.float32)
    quarter = wisdom_dim // 4
    emb = emb.at[_det_hash(wtype, quarter)].set(1.0)
    intensity_range = (wisdom_dim // 2) - quarter
    ipos = int(intensity * intensity_range)
    if ipos < intensity_range:
        emb = emb.at[quarter + ipos].set(intensity)
    emb = emb.at[wisdom_dim // 2 + _det_hash(content, quarter)].set(0.5)
    noise_start = 3 * wisdom_dim // 4
    noise = jax.random.normal(key, (wisdom_dim - noise_start,)) * 0.1
    emb = emb.at[noise_start:].set(noise)
    return emb


if __name__ == "__main__":
    hidden_dim = 32
    wisdom_dim = 16
    num_insights = 8
    batch = 1   # the torch module's expand() logic only supports batch == 1

    root = jax.random.PRNGKey(0)
    k_h, k_p, k_i, k_h2, k_h3 = jax.random.split(root, 5)

    hidden_state = jax.random.normal(k_h, (batch, hidden_dim), jnp.float32)
    params = init_params(k_p, hidden_dim, wisdom_dim)

    # synthesize deterministic "WisdomInsight" embeddings (host-side glue)
    types = ["compassion", "impermanence", "interbeing", "mindfulness"]
    ikeys = jax.random.split(k_i, num_insights)
    insights = jnp.stack([
        create_insight_embedding(ikeys[i], wisdom_dim,
                                 types[i % len(types)],
                                 0.1 + 0.1 * i,
                                 f"insight_content_{i}")
        for i in range(num_insights)
    ])  # (N, wisdom_dim)
    cats = {t: types.count(t) * (num_insights // len(types)) for t in types}

    integrated, info = wisdom_integration_forward(
        hidden_state, insights, params, insight_categories=cats)
    jax.block_until_ready(integrated)
    jax.block_until_ready(info["wisdom_influence"])

    # -------- plain-JAX reference (fallback path of the module) -----------
    def reference(h, ins, p):
        avg = jnp.mean(ins, axis=0, keepdims=True)
        infl = avg @ p["w_out"] + p["b_out"]
        x = h + p["alpha"].reshape(()) * infl
        mu = jnp.mean(x, axis=-1, keepdims=True)
        var = jnp.mean((x - mu) ** 2, axis=-1, keepdims=True)
        out = (x - mu) / jnp.sqrt(var + 1e-5) * p["gamma"] + p["beta"]
        return out, jnp.mean(jnp.abs(infl))

    ref_out, ref_abs = reference(hidden_state, insights, params)
    assert jnp.allclose(integrated, ref_out, atol=1e-5), "output mismatch"
    assert jnp.allclose(info["wisdom_influence"], ref_abs, atol=1e-5), \
        "wisdom_influence mismatch"

    # Multi-tile "parallel" grid path (batch divides evenly into tiles).
    big_hidden = jax.random.normal(k_h2, (32, hidden_dim), jnp.float32)
    big_out, big_info = wisdom_integration_forward(
        big_hidden, insights, params, insight_categories=cats, tile_b=8)
    ref_big, ref_big_abs = reference(big_hidden, insights, params)
    jax.block_until_ready(big_out)
    assert jnp.allclose(big_out, ref_big, atol=1e-5), "tiled batch mismatch"
    assert jnp.allclose(big_info["wisdom_influence"], ref_big_abs, atol=1e-5)

    # Ragged edge block (B not a multiple of the tile): Pallas masks the
    # out-of-bounds rows of the last block, so no batch padding is needed.
    rag_hidden = jax.random.normal(k_h3, (13, hidden_dim), jnp.float32)
    rag_out, _ = wisdom_integration_forward(rag_hidden, insights, params,
                                            insight_categories=cats)
    ref_rag, _ = reference(rag_hidden, insights, params)
    jax.block_until_ready(rag_out)
    assert rag_out.shape == (13, hidden_dim)
    assert jnp.allclose(rag_out, ref_rag, atol=1e-5), "ragged batch mismatch"

    print("KERNEL_OK")
</pallas_src>

<mosaic_0001>
module attributes {stable_mosaic.version = 11 : i64} {
  func.func @_wisdom_fused_kernel(%arg0: i32, %arg1: memref<16x8xf32, #tpu.memory_space<vmem>>, %arg2: memref<16x32xf32, #tpu.memory_space<vmem>>, %arg3: memref<1x32xf32, #tpu.memory_space<vmem>>, %arg4: memref<1x1xf32, #tpu.memory_space<vmem>>, %arg5: memref<2x32xf32, #tpu.memory_space<vmem>>, %arg6: memref<1x32xf32, #tpu.memory_space<vmem>>, %arg7: memref<1x32xf32, #tpu.memory_space<vmem>>, %arg8: memref<1x1xf32, #tpu.memory_space<vmem>>) attributes {dimension_semantics = [#tpu.dimension_semantics<parallel>], iteration_bounds = array<i64: 1>, scalar_prefetch = 0 : i64, scratch_operands = 0 : i64, tpu.core_type = #tpu.core_type<tc>, window_params = [{pipeline_mode = #tpu.pipeline_mode<synchronous>, transform_indices = @transform_0, window_bounds = array<i64: 16, 8>}, {pipeline_mode = #tpu.pipeline_mode<synchronous>, transform_indices = @transform_1, window_bounds = array<i64: 16, 32>}, {pipeline_mode = #tpu.pipeline_mode<synchronous>, transform_indices = @transform_2, window_bounds = array<i64: 1, 32>}, {pipeline_mode = #tpu.pipeline_mode<synchronous>, transform_indices = @transform_3, window_bounds = array<i64: 1, 1>}, {pipeline_mode = #tpu.pipeline_mode<synchronous>, transform_indices = @transform_4, window_bounds = array<i64: 2, 32>}, {transform_indices = @transform_5, window_bounds = array<i64: 1, 32>}, {transform_indices = @transform_6, window_bounds = array<i64: 1, 32>}, {pipeline_mode = #tpu.pipeline_mode<synchronous>, transform_indices = @transform_7, window_bounds = array<i64: 1, 1>}]} {
    %c0 = arith.constant 0 : index
    %c0_0 = arith.constant 0 : index
    %0 = vector.load %arg1[%c0, %c0_0] : memref<16x8xf32, #tpu.memory_space<vmem>>, vector<16x8xf32>
    %cst = arith.constant dense<0.000000e+00> : vector<16xf32>
    %1 = vector.multi_reduction <add>, %0, %cst [1] : vector<16x8xf32> to vector<16xf32>
    %2 = vector.shape_cast %1 : vector<16xf32> to vector<16x1xf32>
    %cst_1 = arith.constant 1.250000e-01 : f32
    %3 = vector.broadcast %cst_1 : f32 to vector<16x1xf32>
    %4 = arith.mulf %2, %3 : vector<16x1xf32>
    %c0_2 = arith.constant 0 : index
    %c0_3 = arith.constant 0 : index
    %5 = vector.load %arg2[%c0_2, %c0_3] : memref<16x32xf32, #tpu.memory_space<vmem>>, vector<16x32xf32>
    %6 = vector.broadcast %4 : vector<16x1xf32> to vector<16x32xf32>
    %7 = arith.mulf %6, %5 : vector<16x32xf32>
    %cst_4 = arith.constant dense<0.000000e+00> : vector<32xf32>
    %8 = vector.multi_reduction <add>, %7, %cst_4 [0] : vector<16x32xf32> to vector<32xf32>
    %9 = vector.shape_cast %8 : vector<32xf32> to vector<1x32xf32>
    %c0_5 = arith.constant 0 : index
    %c0_6 = arith.constant 0 : index
    %10 = vector.load %arg3[%c0_5, %c0_6] : memref<1x32xf32, #tpu.memory_space<vmem>>, vector<1x32xf32>
    %11 = arith.addf %9, %10 : vector<1x32xf32>
    %12 = math.absf %11 : vector<1x32xf32>
    %cst_7 = arith.constant dense<0.000000e+00> : vector<1xf32>
    %13 = vector.multi_reduction <add>, %12, %cst_7 [1] : vector<1x32xf32> to vector<1xf32>
    %14 = vector.shape_cast %13 : vector<1xf32> to vector<1x1xf32>
    %cst_8 = arith.constant 3.125000e-02 : f32
    %15 = vector.broadcast %cst_8 : f32 to vector<1x1xf32>
    %16 = arith.mulf %14, %15 : vector<1x1xf32>
    %c0_9 = arith.constant 0 : index
    %c0_10 = arith.constant 0 : index
    %17 = vector.load %arg8[%c0_9, %c0_10] : memref<1x1xf32, #tpu.memory_space<vmem>>, vector<1x1xf32>
    tpu.vector_store %arg8[%c0_9, %c0_10], %16 {strides = array<i32>} : memref<1x1xf32, #tpu.memory_space<vmem>>, vector<1x1xf32>,
    %c0_11 = arith.constant 0 : index
    %c0_12 = arith.constant 0 : index
    %18 = vector.load %arg6[%c0_11, %c0_12] : memref<1x32xf32, #tpu.memory_space<vmem>>, vector<1x32xf32>
    %c0_13 = arith.constant 0 : index
    %c0_14 = arith.constant 0 : index
    %19 = vector.load %arg4[%c0_13, %c0_14] : memref<1x1xf32, #tpu.memory_space<vmem>>, vector<1x1xf32>
    %20 = vector.broadcast %19 : vector<1x1xf32> to vector<1x32xf32>
    %21 = arith.mulf %20, %11 : vector<1x32xf32>
    %22 = arith.addf %18, %21 : vector<1x32xf32>
    %cst_15 = arith.constant dense<0.000000e+00> : vector<1xf32>
    %23 = vector.multi_reduction <add>, %22, %cst_15 [1] : vector<1x32xf32> to vector<1xf32>
    %24 = vector.shape_cast %23 : vector<1xf32> to vector<1x1xf32>
    %cst_16 = arith.constant 3.125000e-02 : f32
    %25 = vector.broadcast %cst_16 : f32 to vector<1x1xf32>
    %26 = arith.mulf %24, %25 : vector<1x1xf32>
    %27 = vector.broadcast %26 : vector<1x1xf32> to vector<1x32xf32>
    %28 = arith.subf %22, %27 : vector<1x32xf32>
    %29 = arith.mulf %28, %28 : vector<1x32xf32>
    %cst_17 = arith.constant dense<0.000000e+00> : vector<1xf32>
    %30 = vector.multi_reduction <add>, %29, %cst_17 [1] : vector<1x32xf32> to vector<1xf32>
    %31 = vector.shape_cast %30 : vector<1xf32> to vector<1x1xf32>
    %cst_18 = arith.constant 3.125000e-02 : f32
    %32 = vector.broadcast %cst_18 : f32 to vector<1x1xf32>
    %33 = arith.mulf %31, %32 : vector<1x1xf32>
    %cst_19 = arith.constant 9.99999974E-6 : f32
    %34 = vector.broadcast %cst_19 : f32 to vector<1x1xf32>
    %35 = arith.addf %33, %34 : vector<1x1xf32>
    %36 = math.rsqrt %35 : vector<1x1xf32>
    %37 = vector.broadcast %36 : vector<1x1xf32> to vector<1x32xf32>
    %38 = arith.mulf %28, %37 : vector<1x32xf32>
    %c0_20 = arith.constant 0 : index
    %c0_21 = arith.constant 0 : index
    %39 = vector.load %arg5[%c0_20, %c0_21] : memref<2x32xf32, #tpu.memory_space<vmem>>, vector<2x32xf32>
    %40 = vector.extract_strided_slice %39 {offsets = [0, 0], sizes = [1, 32], strides = [1, 1]} : vector<2x32xf32> to vector<1x32xf32>
    %41 = arith.mulf %38, %40 : vector<1x32xf32>
    %42 = vector.extract_strided_slice %39 {offsets = [1, 0], sizes = [1, 32], strides = [1, 1]} : vector<2x32xf32> to vector<1x32xf32>
    %43 = arith.addf %41, %42 : vector<1x32xf32>
    %c0_22 = arith.constant 0 : index
    %c0_23 = arith.constant 0 : index
    %44 = vector.load %arg7[%c0_22, %c0_23] : memref<1x32xf32, #tpu.memory_space<vmem>>, vector<1x32xf32>
    tpu.vector_store %arg7[%c0_22, %c0_23], %43 {strides = array<i32>} : memref<1x32xf32, #tpu.memory_space<vmem>>, vector<1x32xf32>,
    return
  }
  func.func @transform_0(%arg0: i32) -> (i32, i32) {
    %c0_i32 = arith.constant 0 : i32
    %c0_i32_0 = arith.constant 0 : i32
    %c0_i32_1 = arith.constant 0 : i32
    return %c0_i32, %c0_i32_0 : i32, i32
  }
  func.func @transform_1(%arg0: i32) -> (i32, i32) {
    %c0_i32 = arith.constant 0 : i32
    %c0_i32_0 = arith.constant 0 : i32
    %c0_i32_1 = arith.constant 0 : i32
    return %c0_i32, %c0_i32_0 : i32, i32
  }
  func.func @transform_2(%arg0: i32) -> (i32, i32) {
    %c0_i32 = arith.constant 0 : i32
    %c0_i32_0 = arith.constant 0 : i32
    %c0_i32_1 = arith.constant 0 : i32
    return %c0_i32, %c0_i32_0 : i32, i32
  }
  func.func @transform_3(%arg0: i32) -> (i32, i32) {
    %c0_i32 = arith.constant 0 : i32
    %c0_i32_0 = arith.constant 0 : i32
    %c0_i32_1 = arith.constant 0 : i32
    return %c0_i32, %c0_i32_0 : i32, i32
  }
  func.func @transform_4(%arg0: i32) -> (i32, i32) {
    %c0_i32 = arith.constant 0 : i32
    %c0_i32_0 = arith.constant 0 : i32
    %c0_i32_1 = arith.constant 0 : i32
    return %c0_i32, %c0_i32_0 : i32, i32
  }
  func.func @transform_5(%arg0: i32) -> (i32, i32) {
    %c0_i32 = arith.constant 0 : i32
    %c0_i32_0 = arith.constant 0 : i32
    return %arg0, %c0_i32 : i32, i32
  }
  func.func @transform_6(%arg0: i32) -> (i32, i32) {
    %c0_i32 = arith.constant 0 : i32
    %c0_i32_0 = arith.constant 0 : i32
    return %arg0, %c0_i32 : i32, i32
  }
  func.func @transform_7(%arg0: i32) -> (i32, i32) {
    %c0_i32 = arith.constant 0 : i32
    %c0_i32_0 = arith.constant 0 : i32
    %c0_i32_1 = arith.constant 0 : i32
    return %c0_i32, %c0_i32_0 : i32, i32
  }
}

</mosaic_0001>

<llo_original>
// kernel: _wisdom_forward_core.1
$region0: #{_wisdom_forward_core.1}
  #allocation0 [shape = 'u32[]', space=smem, size = 0x4, offset = 0x4, fixed_abs, tag = 'smem constant byte address 0x4 - core index']
  #allocation1 [shape = 'u32[72,128]{1,0:T(1,128)}', space=vmem, size = 0x9000, scoped, tag = 'internal scratch']
  #allocation2 [shape = 'f32[1,1]{1,0:T(1,128)S(1)}', space=vmem, size = 0x200, scoped, tag = 'scoped memory for _wisdom_forward_core.1']
  %s0 = inlined_call_operand.vmem [shape: f32[16,8], index: 0, kind: input, shape index: {}]
  %s1 = inlined_call_operand.vmem [shape: f32[16,32], index: 1, kind: input, shape index: {}]
  %s2 = inlined_call_operand.vmem [shape: f32[1,32], index: 2, kind: input, shape index: {}]
  %s3 = inlined_call_operand.<no memory space> [shape: f32[1,1], index: 3, kind: input, shape index: {}]
  %s4 = inlined_call_operand.vmem [shape: f32[2,32], index: 4, kind: input, shape index: {}]
  %s5 = inlined_call_operand.vmem [shape: f32[1,32], index: 5, kind: input, shape index: {}]
  %s6 = inlined_call_operand.hbm [shape: f32[1,32], index: 6, kind: output, shape index: {0}]
  %s7 = inlined_call_operand.hbm [shape: f32[1,1], index: 7, kind: output, shape index: {1}]
  %8 = xla_tuple %s6, %s7
  %s9 = sld [smem:[#allocation0]]
  $region42: #{_wisdom_forward_core.1} parent=0
    _
  %s11 = ssub.s32 1, %s9
  %s12 = scalar_select 0, %s11, %s9
  %v13 = vstv %s3
  %14 = vst [vmem:[#allocation2] sm:$0x1] %v13
  $region1: #{_wisdom_forward_core.1} parent=0
    #allocation3 [shape = 'u8[512]{0}', space=vmem, size = 0x400, scoped, tag = 'output window, operand 0, single buffered']
    #allocation4 [shape = 's32[1]{0}', space=sflag, size = 0x4, scoped, tag = 'scoped memory for _wisdom_forward_core.1']
    #allocation5 [shape = 'u8[512]{0}', space=vmem, size = 0x400, scoped, tag = 'output window, operand 1, single buffered']
    #allocation6 [shape = 's32[1]{0}', space=sflag, size = 0x4, scoped, tag = 'scoped memory for _wisdom_forward_core.1']
    %15 = vsyncpa [#allocation4], 0
    %16 = vsyncpa [#allocation6], 0
    // Predicated region
    $region2: #{_wisdom_forward_core.1} parent=1 // pred_check
      _
    $region3: #{_wisdom_forward_core.1} parent=1 // pred_check_branch
      %18 = sbr.rel (0) target = $region5
    $region4: #{_wisdom_forward_core.1} parent=1 // pred_region
      _
    $region5: #{_wisdom_forward_core.1} parent=1 // pred_fallthru
      _
    // Predicated region
    $region6: #{_wisdom_forward_core.1} parent=1 // pred_check
      _
    $region7: #{_wisdom_forward_core.1} parent=1 // pred_check_branch
      %20 = sbr.rel (0) target = $region9
    $region8: #{_wisdom_forward_core.1} parent=1 // pred_region
      _
    $region9: #{_wisdom_forward_core.1} parent=1 // pred_fallthru
      _
    // Predicated region
    $region10: #{_wisdom_forward_core.1} parent=1 // pred_check
      _
    $region11: #{_wisdom_forward_core.1} parent=1 // pred_check_branch
      %22 = sbr.rel (0) target = $region13
    $region12: #{_wisdom_forward_core.1} parent=1 // pred_region
      _
    $region13: #{_wisdom_forward_core.1} parent=1 // pred_fallthru
      _
    // Predicated region
    $region14: #{_wisdom_forward_core.1} parent=1 // pred_check
      _
    $region15: #{_wisdom_forward_core.1} parent=1 // pred_check_branch
      %24 = sbr.rel (0) target = $region17
    $region16: #{_wisdom_forward_core.1} parent=1 // pred_region
      _
    $region17: #{_wisdom_forward_core.1} parent=1 // pred_fallthru
      _
    // Predicated region
    $region18: #{_wisdom_forward_core.1} parent=1 // pred_check
      _
    $region19: #{_wisdom_forward_core.1} parent=1 // pred_check_branch
      %26 = sbr.rel (0) target = $region21
    $region20: #{_wisdom_forward_core.1} parent=1 // pred_region
      _
    $region21: #{_wisdom_forward_core.1} parent=1 // pred_fallthru
      _
    // Predicated region
    $region22: #{_wisdom_forward_core.1} parent=1 // pred_check
      _
    $region23: #{_wisdom_forward_core.1} parent=1 // pred_check_branch
      %28 = sbr.rel (0) target = $region25
    $region24: #{_wisdom_forward_core.1} parent=1 // pred_region
      _
    $region25: #{_wisdom_forward_core.1} parent=1 // pred_fallthru
      _
    %v29 = vld [vmem:[%s0] sm:$0xff]
    %v30 = vld [vmem:[%s0 + $0x8] sm:$0xff]
    %vm31 = vcmask 64512
    %v32 = vsel %vm31, %v29, 0.0
    %33 = vadd.xlane.f32.xlu0 %v32
    %v34 = vpop.xlane.xlu0 %33
    %v35 = vsel %vm31, %v30, 0.0
    %36 = vadd.xlane.f32.xlu0 %v35
    %v37 = vpop.xlane.xlu0 %36
    %v38 = vmul.f32 %v34, 0.125
    %v39 = vmul.f32 %v37, 0.125
    %v40 = vld [vmem:[%s1] sm:$0xff]
    %v41 = vld [vmem:[%s1 + $0x8] sm:$0xff]
    %v42 = vmul.f32 %v38, %v40
    %v43 = vmul.f32 %v39, %v41
    %vm44 = vcmask 261120
    %v45 = vsel %vm44, %v42, 0.0
    %v46 = vsel %vm44, %v43, 0.0
    %v47 = vadd.f32 %v45, %v46
    %v48 = vrot.slane %v47, 4
    %v49 = vadd.f32 %v47, %v48
    %v50 = vrot.slane %v49, 2
    %v51 = vadd.f32 %v49, %v50
    %v52 = vrot.slane %v51, 1
    %v53 = vadd.f32 %v51, %v52
    %v54 = vld [vmem:[%s2] sm:$0x1]
    %v55 = vadd.f32 %v53, %v54
    %v56 = vand.u32 2147483647, %v55
    %vm57 = vcmask 253952
    %v58 = vsel %vm57, %v56, 0.0
    %59 = vadd.xlane.f32.xlu0 %v58
    %v60 = vpop.xlane.xlu0 %59
    %v61 = vmul.f32 %v60, 0.03125
    %vm62 = vcmask 0
    %63 = vst.msk [vmem:[#allocation5] sm:$0x1] %vm62, %v61
    %v64 = vld [vmem:[%s5] sm:$0x1]
    %v65 = vld [vmem:[#allocation2] sm:$0x1]
    %67 = vset.pattern.permute.xlu0 0
    %68 = vperm.xlu0 %67, %v65
    %v69 = vpop.permute.xlu0 %68
    %v71 = vperm.slane %v69, 0
    %v72 = vmul.f32 %v71, %v55
    %v73 = vadd.f32 %v64, %v72
    %v74 = vsel %vm57, %v73, 0.0
    %75 = vadd.xlane.f32.xlu0 %v74
    %v76 = vpop.xlane.xlu0 %75
    %v77 = vmul.f32 %v76, 0.03125
    %v78 = vsub.f32 %v73, %v77
    %v79 = vmul.f32 %v78, %v78
    %v80 = vsel %vm57, %v79, 0.0
    %81 = vadd.xlane.f32.xlu0 %v80
    %v82 = vpop.xlane.xlu0 %81
    %v83 = vmul.f32 %v82, 0.03125
    %v84 = vadd.f32 %v83, 1e-05
    %v85 = vrsqrt.pop %v84
    %v86 = vmul.f32 %v85, %v84
    %v87 = vmul.f32 %v86, %v85
    %v88 = vmul.f32 0.5, %v87
    %v89 = vsub.f32 1.5, %v88
    %v90 = vmul.f32 %v85, %v89
    %vm91 = vweird.f32 %v84
    %vm92 = vweird.f32 %v85
    %vm93 = vmor %vm91, %vm92
    %v94 = vsel %vm93, %v85, %v90
    %v95 = vmul.f32 %v78, %v94
    %v96 = vld [vmem:[%s4] sm:$0x3]
    %v97 = vmul.f32 %v95, %v96
    %99 = vst [vmem:[#allocation1] sm:$0xff] %v96
    %s100 = scalar_lea.vmem [#allocation1], 1
    %v101 = vld [vmem:[%s100] ss:$9 sm:$0xff]
    %v103 = vadd.f32 %v97, %v101
    %104 = vst.msk [vmem:[#allocation3] sm:$0x1] %vm57, %v103
    // Predicated region
    $region26: #{_wisdom_forward_core.1} parent=1 // pred_check
      _
    $region27: #{_wisdom_forward_core.1} parent=1 // pred_check_branch
      %106 = sbr.rel (0) target = $region29
    $region28: #{_wisdom_forward_core.1} parent=1 // pred_region
      %108 = vsyncadd [#allocation4], 0
      %s110 = sshll.u32 [#allocation3], 4
      %s111 = int_to_ptr.vmem [resolvable:$true] %s110
      %s112 = sshll.u32 %s6, 4
      %s113 = int_to_ptr.hbm [resolvable:$true] %s112
      %115 = dma.vmem_to_hbm [thread:$0]  %s111, 16, %s113, [#allocation4]
    $region29: #{_wisdom_forward_core.1} parent=1 // pred_fallthru
      _
    // Predicated region
    $region30: #{_wisdom_forward_core.1} parent=1 // pred_check
      _
    $region31: #{_wisdom_forward_core.1} parent=1 // pred_check_branch
      %117 = sbr.rel (0) target = $region33
    $region32: #{_wisdom_forward_core.1} parent=1 // pred_region
      %119 = vsyncadd [#allocation6], 0
      %s121 = sshll.u32 [#allocation5], 4
      %s122 = int_to_ptr.vmem [resolvable:$true] %s121
      %s123 = sshll.u32 %s7, 4
      %s124 = int_to_ptr.hbm [resolvable:$true] %s123
      %126 = dma.vmem_to_hbm [thread:$0]  %s122, 16, %s124, [#allocation6]
    $region33: #{_wisdom_forward_core.1} parent=1 // pred_fallthru
      _
    // Predicated region
    $region34: #{_wisdom_forward_core.1} parent=1 // pred_check
      _
    $region35: #{_wisdom_forward_core.1} parent=1 // pred_check_branch
      %128 = sbr.rel (0) target = $region37
    $region36: #{_wisdom_forward_core.1} parent=1 // pred_region
      %130 = dma.done [#allocation4], 16
    $region37: #{_wisdom_forward_core.1} parent=1 // pred_fallthru
      _
    // Predicated region
    $region38: #{_wisdom_forward_core.1} parent=1 // pred_check
      _
    $region39: #{_wisdom_forward_core.1} parent=1 // pred_check_branch
      %132 = sbr.rel (0) target = $region41
    $region40: #{_wisdom_forward_core.1} parent=1 // pred_region
      %134 = dma.done [#allocation6], 16
    $region41: #{_wisdom_forward_core.1} parent=1 // pred_fallthru
      _
    %135 = vsyncpa [#allocation4], 1
    %136 = vsyncpa [#allocation6], 1

</llo_original>
